<compile_context>
chip_gen: v5e
topology: v5e:2x2
jax: 0.10.0
libtpu: 0.0.40
codegen_flags: <defaults>
</compile_context>

<pallas_src>
import math
from functools import partial

import jax
import jax.numpy as jnp
from jax.experimental import pallas as pl
from jax.experimental.pallas import tpu as pltpu


# ----------------------------------------------------------------------------
# layout helpers (static, wrapper-side)
# ----------------------------------------------------------------------------
def _fold_rows(H, W):
    """Smallest m (divisor of H) that makes the folded last dim m*W a multiple of 128."""
    for m in range(1, H + 1):
        if H % m == 0 and (m * W) % 128 == 0 and m * W <= 4096:
            return m
    return 1


def _row_tile(Hf, L, pad, pd, m, budget_elems=128 * 1024):
    """Row-tile height TH: divisor of Hf, multiple of 8 (or full), TH*L under budget.

    Prefer tiles aligned to the phase row band so that fully-zero pad bands become whole
    row tiles (the kernel then skips their field reads entirely)."""
    cands = [t for t in range(8, Hf + 1, 8) if Hf % t == 0 and t * L <= budget_elems]
    if Hf * L <= budget_elems and Hf not in cands:
        cands.append(Hf)
    if not cands:
        return Hf
    if pad > 0 and pad % m == 0 and pd % m == 0:
        pad_f, pd_f = pad // m, pd // m
        aligned = [t for t in cands if pad_f % t == 0 and pd_f % t == 0]
        if aligned:
            return max(aligned)
    return max(cands)


# ----------------------------------------------------------------------------
# kernel: cos/sin of the (pre-quantized, padded) phase plane -> cached window mask
#         -> complex multiply with the field;  zero-band row tiles write zeros.
# ----------------------------------------------------------------------------
def _phase_mask_kernel(ph_ref, x_ref, o_ref, mr_ref, mi_ref, *,
                       W, m, TH, pd, pad, r_lo, r_hi, R):
    r = pl.program_id(0)
    b = pl.program_id(1)
    L = m * W
    has_skip = (r_lo > 0) or (r_hi < R)

    def compute_mask():
        phase = ph_ref[...]                                   # (TH, L), already quantized * pi
        # inside-the-phase-window test from small iotas:
        #   element (i, j) maps to original row = (r*TH + i)*m + j//W, col = j % W
        j = jax.lax.broadcasted_iota(jnp.int32, (1, L), 1)
        rowoff = jnp.zeros((1, L), jnp.int32)
        for k in range(1, m):                                 # j // W without vector int div
            rowoff = rowoff + (j >= k * W).astype(jnp.int32)
        col = j - W * rowoff
        col_in = (col >= pad) & (col < pad + pd)              # (1, L)
        i = jax.lax.broadcasted_iota(jnp.int32, (TH, 1), 0)
        row = (r * TH + i) * m + rowoff                       # (TH, L) by broadcast
        inside = (row >= pad) & (row < pad + pd) & col_in
        mr_ref[...] = jnp.where(inside, jnp.cos(phase), 0.0)
        mi_ref[...] = jnp.where(inside, jnp.sin(phase), 0.0)

    def complex_mul():
        xr = x_ref[0, 0]
        xi = x_ref[0, 1]
        mr = mr_ref[...]
        mi = mi_ref[...]
        o_ref[0, 0] = xr * mr - xi * mi
        o_ref[0, 1] = xr * mi + xi * mr

    if has_skip:
        in_band = (r >= r_lo) & (r < r_hi)

        @pl.when(jnp.logical_not(in_band))
        def _():
            o_ref[...] = jnp.zeros_like(o_ref)                # fully-outside row tile -> zeros

        @pl.when(in_band & (b == 0))
        def _():
            compute_mask()                                    # once per row tile, reused for all b

        @pl.when(in_band)
        def _():
            complex_mul()
    else:
        @pl.when(b == 0)
        def _():
            compute_mask()

        complex_mul()


def phase_mask_forward(w_p, x, *, whole_dim, interpret=False):
    """w_p: (pd, pd) f32; x: (B, 2, H, W) f32 stacked re/im -> (B, 2, H, W) f32."""
    B, two, H, W = x.shape
    assert two == 2 and H == whole_dim and W == whole_dim
    pd = w_p.shape[-1]
    pad = (whole_dim - pd) // 2

    # ---- tiny O(pd^2) parameter prologue, hoisted out of the kernel ------------------
    t = jnp.tanh(w_p)
    max_w = jnp.max(jnp.abs(t))
    wn = t * (0.5 / jnp.maximum(max_w, jnp.float32(1e-12))) + 0.5   # eps-guarded scale
    q = jnp.round(wn * 255.0) / 255.0                               # Quantizer.forward (8 bit)
    phase = (1.999 * q - 1.0) * math.pi

    # ---- lane-dense folded layout ------------------------------------------------------
    m = _fold_rows(H, W)
    L = m * W
    Hf = H // m
    TH = _row_tile(Hf, L, pad, pd, m)
    R = Hf // TH

    phase_pad = jnp.pad(phase, ((pad, pad), (pad, pad))).reshape(Hf, L)
    xf = x.reshape(B, 2, Hf, L)

    # row tiles fully outside the phase window (static): [0, r_lo) and [r_hi, R)
    tile_rows = TH * m
    r_lo = pad // tile_rows
    r_hi = -(-(pad + pd) // tile_rows)          # cdiv
    has_skip = (r_lo > 0) or (r_hi < R)

    kernel = partial(_phase_mask_kernel, W=W, m=m, TH=TH, pd=pd, pad=pad,
                     r_lo=r_lo, r_hi=r_hi, R=R)

    if has_skip:
        # out-of-band steps map inputs to a constant in-band block -> Pallas skips re-DMA
        def ph_index(r, b):
            return (jnp.clip(r, r_lo, r_hi - 1), 0)

        def x_index(r, b):
            in_band = (r >= r_lo) & (r < r_hi)
            return (jnp.where(in_band, b, 0), 0, jnp.clip(r, r_lo, r_hi - 1), 0)
    else:
        ph_index = lambda r, b: (r, 0)
        x_index = lambda r, b: (b, 0, r, 0)

    out_index = lambda r, b: (b, 0, r, 0)

    n_in = (r_hi - r_lo) * TH * L               # in-band elements of one plane
    cost = pl.CostEstimate(
        flops=6 * B * n_in + 10 * n_in,
        transcendentals=2 * n_in,
        bytes_accessed=4 * (n_in + 2 * B * n_in + 2 * B * Hf * L),
    )

    out = pl.pallas_call(
        kernel,
        out_shape=jax.ShapeDtypeStruct((B, 2, Hf, L), jnp.float32),
        grid=(R, B),
        in_specs=[
            pl.BlockSpec((TH, L), ph_index),          # padded phase plane (1 f32 plane)
            pl.BlockSpec((1, 2, TH, L), x_index),     # stacked re/im field
        ],
        out_specs=pl.BlockSpec((1, 2, TH, L), out_index),
        scratch_shapes=[pltpu.VMEM((TH, L), jnp.float32),   # cached mask real
                        pltpu.VMEM((TH, L), jnp.float32)],  # cached mask imag
        compiler_params=pltpu.CompilerParams(
            # rows independent -> "parallel" (megacore); batch carries the mask scratch
            # so it MUST be "arbitrary".
            dimension_semantics=("parallel", "arbitrary"),
        ),
        cost_estimate=cost,
        interpret=interpret,
    )(phase_pad, xf)
    return out.reshape(B, 2, H, W)


# ----------------------------------------------------------------------------
# Module wrapper
# ----------------------------------------------------------------------------
class PhaseMaskPallas:
    def __init__(self, whole_dim, phase_dim, key):
        self.whole_dim = whole_dim
        self.phase_dim = phase_dim
        # kaiming_uniform_(a=sqrt(5)) on a (1, pd, pd) tensor:
        #   fan_in = pd*pd, gain = sqrt(2/(1+5)) -> bound = 1/pd
        bound = 1.0 / phase_dim
        self.w_p = jax.random.uniform(
            key, (phase_dim, phase_dim), dtype=jnp.float32, minval=-bound, maxval=bound
        )

    def __call__(self, x):
        # x: (B, 2, whole_dim, whole_dim) stacked (real, imag) planes of the complex field
        # TODO(synk): forward only — the PyTorch Quantizer/ScaleSigner STE backward is not
        # reproduced (grad through jnp.round is zero under jax.grad).
        return phase_mask_forward(self.w_p, x, whole_dim=self.whole_dim)


# ----------------------------------------------------------------------------
# Pure-JAX reference for sanity checking
# ----------------------------------------------------------------------------
def reference(w_p, x, whole_dim):
    t = jnp.tanh(w_p)
    max_w = jnp.max(jnp.abs(t))
    wn = t * (0.5 / jnp.maximum(max_w, jnp.float32(1e-12))) + 0.5
    q = jnp.round(wn * 255.0) / 255.0
    phase = (1.999 * q - 1.0) * math.pi
    p = (whole_dim - w_p.shape[-1]) // 2
    mr = jnp.pad(jnp.cos(phase), ((p, p), (p, p)))
    mi = jnp.pad(jnp.sin(phase), ((p, p), (p, p)))
    xr, xi = x[:, 0], x[:, 1]
    return jnp.stack([xr * mr - xi * mi, xr * mi + xi * mr], axis=1)


if __name__ == "__main__":
    key = jax.random.PRNGKey(0)
    k_w, k_x, k_w2, k_x2 = jax.random.split(key, 4)

    # main config: padded phase window (exercises zero-band skip + batch-cached mask)
    whole_dim, phase_dim, batch = 64, 32, 2
    module = PhaseMaskPallas(whole_dim, phase_dim, k_w)
    x = jax.random.normal(k_x, (batch, 2, whole_dim, whole_dim), dtype=jnp.float32)
    out = jax.block_until_ready(module(x))
    ref = reference(module.w_p, x, whole_dim)
    assert out.shape == (batch, 2, whole_dim, whole_dim)
    assert jnp.allclose(out, ref, atol=1e-5, rtol=1e-5)

    # secondary config: pad == 0 (exercises the no-skip fallback path)
    module2 = PhaseMaskPallas(32, 32, k_w2)
    x2 = jax.random.normal(k_x2, (2, 2, 32, 32), dtype=jnp.float32)
    out2 = jax.block_until_ready(module2(x2))
    ref2 = reference(module2.w_p, x2, 32)
    assert jnp.allclose(out2, ref2, atol=1e-5, rtol=1e-5)

    print("KERNEL_OK")
</pallas_src>

<mosaic_0001>
module attributes {stable_mosaic.version = 11 : i64} {
  func.func @_phase_mask_kernel(%arg0: i32, %arg1: i32, %arg2: memref<8x128xf32, #tpu.memory_space<vmem>>, %arg3: memref<1x2x8x128xf32, #tpu.memory_space<vmem>>, %arg4: memref<1x2x8x128xf32, #tpu.memory_space<vmem>>, %arg5: memref<8x128xf32, #tpu.memory_space<vmem>>, %arg6: memref<8x128xf32, #tpu.memory_space<vmem>>) attributes {dimension_semantics = [#tpu.dimension_semantics<parallel>, #tpu.dimension_semantics<arbitrary>], iteration_bounds = array<i64: 4, 2>, scalar_prefetch = 0 : i64, scratch_operands = 2 : i64, tpu.core_type = #tpu.core_type<tc>, window_params = [{transform_indices = @transform_0, window_bounds = array<i64: 8, 128>}, {transform_indices = @transform_1, window_bounds = array<i64: 1, 2, 8, 128>}, {transform_indices = @transform_2, window_bounds = array<i64: 1, 2, 8, 128>}]} {
    %c1_i32 = arith.constant 1 : i32
    %0 = arith.cmpi sge, %arg0, %c1_i32 : i32
    %c3_i32 = arith.constant 3 : i32
    %1 = arith.cmpi slt, %arg0, %c3_i32 : i32
    %2 = arith.andi %0, %1 : i1
    %true = arith.constant true
    %3 = arith.xori %2, %true : i1
    %4 = arith.extui %3 : i1 to i32
    %c0_i32 = arith.constant 0 : i32
    %5 = arith.cmpi ne, %4, %c0_i32 : i32
    scf.if %5 {
      %cst = arith.constant 0.000000e+00 : f32
      %12 = vector.broadcast %cst : f32 to vector<1x2x8x128xf32>
      %c0 = arith.constant 0 : index
      %c0_3 = arith.constant 0 : index
      %c0_4 = arith.constant 0 : index
      %c0_5 = arith.constant 0 : index
      %13 = vector.load %arg4[%c0, %c0_3, %c0_4, %c0_5] : memref<1x2x8x128xf32, #tpu.memory_space<vmem>>, vector<1x2x8x128xf32>
      tpu.vector_store %arg4[%c0, %c0_3, %c0_4, %c0_5], %12 {strides = array<i32>} : memref<1x2x8x128xf32, #tpu.memory_space<vmem>>, vector<1x2x8x128xf32>,
    } else {
    }
    %c0_i32_0 = arith.constant 0 : i32
    %6 = arith.cmpi eq, %arg1, %c0_i32_0 : i32
    %7 = arith.andi %2, %6 : i1
    %8 = arith.extui %7 : i1 to i32
    %c0_i32_1 = arith.constant 0 : i32
    %9 = arith.cmpi ne, %8, %c0_i32_1 : i32
    scf.if %9 {
      %c0 = arith.constant 0 : index
      %c0_3 = arith.constant 0 : index
      %12 = vector.load %arg2[%c0, %c0_3] : memref<8x128xf32, #tpu.memory_space<vmem>>, vector<8x128xf32>
      %13 = tpu.iota {dimensions = array<i32: 1>} : vector<1x128xi32>
      %c0_i32_4 = arith.constant 0 : i32
      %14 = vector.broadcast %c0_i32_4 : i32 to vector<1x128xi32>
      %c64_i32 = arith.constant 64 : i32
      %15 = vector.broadcast %c64_i32 : i32 to vector<1x128xi32>
      %16 = arith.cmpi sge, %13, %15 : vector<1x128xi32>
      %17 = arith.extui %16 : vector<1x128xi1> to vector<1x128xi32>
      %18 = arith.addi %14, %17 : vector<1x128xi32>
      %c64_i32_5 = arith.constant 64 : i32
      %19 = vector.broadcast %c64_i32_5 : i32 to vector<1x128xi32>
      %20 = arith.muli %19, %18 : vector<1x128xi32>
      %21 = arith.subi %13, %20 : vector<1x128xi32>
      %c16_i32 = arith.constant 16 : i32
      %22 = vector.broadcast %c16_i32 : i32 to vector<1x128xi32>
      %23 = arith.cmpi sge, %21, %22 : vector<1x128xi32>
      %c48_i32 = arith.constant 48 : i32
      %24 = vector.broadcast %c48_i32 : i32 to vector<1x128xi32>
      %25 = arith.cmpi slt, %21, %24 : vector<1x128xi32>
      %26 = arith.andi %23, %25 : vector<1x128xi1>
      %27 = tpu.iota {dimensions = array<i32: 0>} : vector<8x1xi32>
      %c8_i32 = arith.constant 8 : i32
      %28 = arith.muli %arg0, %c8_i32 : i32
      %29 = vector.broadcast %28 : i32 to vector<8x1xi32>
      %30 = arith.addi %29, %27 : vector<8x1xi32>
      %c2_i32 = arith.constant 2 : i32
      %31 = vector.broadcast %c2_i32 : i32 to vector<8x1xi32>
      %32 = arith.muli %30, %31 : vector<8x1xi32>
      %33 = vector.broadcast %32 : vector<8x1xi32> to vector<8x128xi32>
      %34 = vector.broadcast %18 : vector<1x128xi32> to vector<8x128xi32>
      %35 = arith.addi %33, %34 : vector<8x128xi32>
      %c16_i32_6 = arith.constant 16 : i32
      %36 = vector.broadcast %c16_i32_6 : i32 to vector<8x128xi32>
      %37 = arith.cmpi sge, %35, %36 : vector<8x128xi32>
      %c48_i32_7 = arith.constant 48 : i32
      %38 = vector.broadcast %c48_i32_7 : i32 to vector<8x128xi32>
      %39 = arith.cmpi slt, %35, %38 : vector<8x128xi32>
      %40 = arith.andi %37, %39 : vector<8x128xi1>
      %41 = vector.broadcast %26 : vector<1x128xi1> to vector<8x128xi1>
      %42 = arith.andi %40, %41 : vector<8x128xi1>
      %43 = math.cos %12 : vector<8x128xf32>
      %cst = arith.constant 0.000000e+00 : f32
      %44 = vector.broadcast %cst : f32 to vector<8x128xf32>
      %45 = arith.select %42, %43, %44 : vector<8x128xi1>, vector<8x128xf32>
      %c0_8 = arith.constant 0 : index
      %c0_9 = arith.constant 0 : index
      %46 = vector.load %arg5[%c0_8, %c0_9] : memref<8x128xf32, #tpu.memory_space<vmem>>, vector<8x128xf32>
      tpu.vector_store %arg5[%c0_8, %c0_9], %45 {strides = array<i32>} : memref<8x128xf32, #tpu.memory_space<vmem>>, vector<8x128xf32>,
      %47 = math.sin %12 : vector<8x128xf32>
      %cst_10 = arith.constant 0.000000e+00 : f32
      %48 = vector.broadcast %cst_10 : f32 to vector<8x128xf32>
      %49 = arith.select %42, %47, %48 : vector<8x128xi1>, vector<8x128xf32>
      %c0_11 = arith.constant 0 : index
      %c0_12 = arith.constant 0 : index
      %50 = vector.load %arg6[%c0_11, %c0_12] : memref<8x128xf32, #tpu.memory_space<vmem>>, vector<8x128xf32>
      tpu.vector_store %arg6[%c0_11, %c0_12], %49 {strides = array<i32>} : memref<8x128xf32, #tpu.memory_space<vmem>>, vector<8x128xf32>,
    } else {
    }
    %10 = arith.extui %2 : i1 to i32
    %c0_i32_2 = arith.constant 0 : i32
    %11 = arith.cmpi ne, %10, %c0_i32_2 : i32
    scf.if %11 {
      %c0 = arith.constant 0 : index
      %c0_3 = arith.constant 0 : index
      %c0_4 = arith.constant 0 : index
      %c0_5 = arith.constant 0 : index
      %12 = vector.load %arg3[%c0, %c0_3, %c0_4, %c0_5] : memref<1x2x8x128xf32, #tpu.memory_space<vmem>>, vector<1x1x8x128xf32>
      %13 = vector.shape_cast %12 : vector<1x1x8x128xf32> to vector<8x128xf32>
      %c0_6 = arith.constant 0 : index
      %c1 = arith.constant 1 : index
      %c0_7 = arith.constant 0 : index
      %c0_8 = arith.constant 0 : index
      %14 = vector.load %arg3[%c0_6, %c1, %c0_7, %c0_8] : memref<1x2x8x128xf32, #tpu.memory_space<vmem>>, vector<1x1x8x128xf32>
      %15 = vector.shape_cast %14 : vector<1x1x8x128xf32> to vector<8x128xf32>
      %c0_9 = arith.constant 0 : index
      %c0_10 = arith.constant 0 : index
      %16 = vector.load %arg5[%c0_9, %c0_10] : memref<8x128xf32, #tpu.memory_space<vmem>>, vector<8x128xf32>
      %c0_11 = arith.constant 0 : index
      %c0_12 = arith.constant 0 : index
      %17 = vector.load %arg6[%c0_11, %c0_12] : memref<8x128xf32, #tpu.memory_space<vmem>>, vector<8x128xf32>
      %18 = arith.mulf %13, %16 : vector<8x128xf32>
      %19 = arith.mulf %15, %17 : vector<8x128xf32>
      %20 = arith.subf %18, %19 : vector<8x128xf32>
      %c0_13 = arith.constant 0 : index
      %c0_14 = arith.constant 0 : index
      %c0_15 = arith.constant 0 : index
      %c0_16 = arith.constant 0 : index
      %21 = vector.load %arg4[%c0_13, %c0_14, %c0_15, %c0_16] : memref<1x2x8x128xf32, #tpu.memory_space<vmem>>, vector<1x1x8x128xf32>
      %22 = vector.shape_cast %21 : vector<1x1x8x128xf32> to vector<8x128xf32>
      %23 = vector.shape_cast %20 : vector<8x128xf32> to vector<1x1x8x128xf32>
      tpu.vector_store %arg4[%c0_13, %c0_14, %c0_15, %c0_16], %23 {strides = array<i32>} : memref<1x2x8x128xf32, #tpu.memory_space<vmem>>, vector<1x1x8x128xf32>,
      %24 = arith.mulf %13, %17 : vector<8x128xf32>
      %25 = arith.mulf %15, %16 : vector<8x128xf32>
      %26 = arith.addf %24, %25 : vector<8x128xf32>
      %c0_17 = arith.constant 0 : index
      %c1_18 = arith.constant 1 : index
      %c0_19 = arith.constant 0 : index
      %c0_20 = arith.constant 0 : index
      %27 = vector.load %arg4[%c0_17, %c1_18, %c0_19, %c0_20] : memref<1x2x8x128xf32, #tpu.memory_space<vmem>>, vector<1x1x8x128xf32>
      %28 = vector.shape_cast %27 : vector<1x1x8x128xf32> to vector<8x128xf32>
      %29 = vector.shape_cast %26 : vector<8x128xf32> to vector<1x1x8x128xf32>
      tpu.vector_store %arg4[%c0_17, %c1_18, %c0_19, %c0_20], %29 {strides = array<i32>} : memref<1x2x8x128xf32, #tpu.memory_space<vmem>>, vector<1x1x8x128xf32>,
    } else {
    }
    return
  }
  func.func @transform_0(%arg0: i32, %arg1: i32) -> (i32, i32) {
    %c1_i32 = arith.constant 1 : i32
    %c2_i32 = arith.constant 2 : i32
    %0 = arith.maxsi %c1_i32, %arg0 : i32
    %1 = arith.minsi %c2_i32, %0 : i32
    %c0_i32 = arith.constant 0 : i32
    %c0_i32_0 = arith.constant 0 : i32
    return %1, %c0_i32 : i32, i32
  }
  func.func @transform_1(%arg0: i32, %arg1: i32) -> (i32, i32, i32, i32) {
    %c1_i32 = arith.constant 1 : i32
    %0 = arith.cmpi sge, %arg0, %c1_i32 : i32
    %c3_i32 = arith.constant 3 : i32
    %1 = arith.cmpi slt, %arg0, %c3_i32 : i32
    %2 = arith.andi %0, %1 : i1
    %c0_i32 = arith.constant 0 : i32
    %3 = arith.select %2, %arg1, %c0_i32 : i32
    %c1_i32_0 = arith.constant 1 : i32
    %c2_i32 = arith.constant 2 : i32
    %4 = arith.maxsi %c1_i32_0, %arg0 : i32
    %5 = arith.minsi %c2_i32, %4 : i32
    %c0_i32_1 = arith.constant 0 : i32
    %c0_i32_2 = arith.constant 0 : i32
    %c0_i32_3 = arith.constant 0 : i32
    return %3, %c0_i32_1, %5, %c0_i32_2 : i32, i32, i32, i32
  }
  func.func @transform_2(%arg0: i32, %arg1: i32) -> (i32, i32, i32, i32) {
    %c0_i32 = arith.constant 0 : i32
    %c0_i32_0 = arith.constant 0 : i32
    %c0_i32_1 = arith.constant 0 : i32
    return %arg1, %c0_i32, %arg0, %c0_i32_0 : i32, i32, i32, i32
  }
}

</mosaic_0001>

<llo_original>
// kernel: tpu_custom_call.1
$region0: #{tpu_custom_call.1}
  #allocation0 [shape = 'u32[]', space=smem, size = 0x4, offset = 0x4, fixed_abs, tag = 'smem constant byte address 0x4 - core index']
  #allocation1 [shape = 'u32[72,128]{1,0:T(1,128)}', space=vmem, size = 0x9000, scoped, tag = 'internal scratch']
  #allocation2 [shape = 'f32[8,128]{1,0:T(8,128)}', space=vmem, size = 0x1000, scoped, tag = 'scratch operand']
  #allocation3 [shape = 'f32[8,128]{1,0:T(8,128)}', space=vmem, size = 0x1000, scoped, tag = 'scratch operand']
  %s0 = inlined_call_operand.hbm [shape: f32[32,128], index: 0, kind: input, shape index: {}]
  %s1 = inlined_call_operand.hbm [shape: f32[2,2,32,128], index: 1, kind: input, shape index: {}]
  %s2 = inlined_call_operand.hbm [shape: f32[2,2,32,128], index: 2, kind: output, shape index: {}]
  %s3 = sld [smem:[#allocation0]]
  $region61: #{tpu_custom_call.1} parent=0
    _
  %s5 = ssub.s32 1, %s3
  %s6 = scalar_select 0, %s5, %s3
  $region1: #{tpu_custom_call.1} parent=0
    #allocation4 [shape = 'u8[8192]{0}', space=vmem, size = 0x2000, scoped, tag = 'input window, operand 0']
    #allocation5 [shape = 's32[2]{0}', space=sflag, size = 0x8, scoped, tag = 'scoped memory for tpu_custom_call.1']
    #allocation6 [shape = 's32[2]{0}', space=sflag, size = 0x8, scoped, tag = 'scoped memory for tpu_custom_call.1']
    #allocation7 [shape = 'u8[16384]{0}', space=vmem, size = 0x4000, scoped, tag = 'input window, operand 1']
    #allocation8 [shape = 's32[2]{0}', space=sflag, size = 0x8, scoped, tag = 'scoped memory for tpu_custom_call.1']
    #allocation9 [shape = 'u8[16384]{0}', space=vmem, size = 0x4000, scoped, tag = 'output window, operand 0']
    %7 = vsyncpa [#allocation5], 0
    %s8 = scalar_lea.sflag [#allocation5], 1
    %9 = vsyncpa %s8, 0
    %10 = vsyncpa [#allocation8], 0
    %s11 = scalar_lea.sflag [#allocation8], 1
    %12 = vsyncpa %s11, 0
    %13 = vsyncpa [#allocation6], 0
    %s14 = scalar_lea.sflag [#allocation6], 1
    %15 = vsyncpa %s14, 0
    loop: start=0, step=1, limit=10
    $region2: #{tpu_custom_call.1} parent=1 // loop_pre_header
      _
    $region3: #{tpu_custom_call.1} parent=1 // loop_header
      %s17 = sphi 0, %s21
      %p18 = scmp.ge.s32.totalorder %s17, 10
      %s24 = sphi 0, %s36
      %s25 = sphi 0, %s32
      %s26 = sphi 0, %s24
      %s27 = sphi 0, %s25
      %s28 = sphi 0, %s26
      %s29 = sphi 0, %s27
      %s47 = sphi 0, %s49
      %s50 = sphi 0, %s47
      %s51 = sphi 0, %s50
      %s67 = sphi 0, %s51
      %s93 = sphi 0, %s95
      %s96 = sphi 0, %s93
      %s97 = sphi 0, %s96
      %s113 = sphi 0, %s97
      %s121 = sphi 0, %s123
      %s124 = sphi 0, %s121
      %s125 = sphi 0, %s124
      %s141 = sphi 0, %s125
    $region4: #{tpu_custom_call.1} parent=1 // loop_header_branch
      %20 = sbr.rel (%p18) target = $region8
    $region5: #{tpu_custom_call.1} parent=1 // loop_body
      %s22 = ssub.s32 %s17, 1
      %s23 = ssub.s32 %s17, 2
      %s30 = sadd.s32 1, %s25
      %p31 = scmp.ge.s32.totalorder %s30, 2
      %s32 = scalar_select %p31, 0, %s30
      %s33 = sadd.s32 1, %s24
      %s34 = scalar_select %p31, %s33, %s24
      %p35 = scmp.ge.s32.totalorder %s34, 4
      %s36 = scalar_select %p35, 0, %s34
      %p37 = scmp.gt.s32.totalorder %s24, 1
      %s38 = scalar_select %p37, %s24, 1
      %p39 = scmp.lt.s32.totalorder %s38, 2
      %s40 = scalar_select %p39, %s38, 2
      %p41 = scmp.gt.s32.totalorder %s36, 1
      %s42 = scalar_select %p41, %s36, 1
      %p43 = scmp.lt.s32.totalorder %s42, 2
      %s44 = scalar_select %p43, %s42, 2
      %s45 = ssub.s32 %s40, %s44
      %p46 = scmp.eq.s32.totalorder %s45, 0
      %s48 = sadd.s32 %s47, 1
      %s49 = scalar_select %p46, %s47, %s48
      %p52 = pneg %p46
      %p53 = scmp.eq.s32.totalorder %s17, 7
      %p54 = por %p52, %p53
      %p55 = scmp.ne.s32.totalorder %s47, %s50
      %p56 = scmp.eq.s32.totalorder %s17, 0
      %p57 = por %p55, %p56
      %p58 = scmp.ne.s32.totalorder %s47, %s50
      %p59 = scmp.eq.s32.totalorder %s22, 7
      %p60 = por %p58, %p59
      %p61 = scmp.ne.s32.totalorder %s50, %s51
      %p62 = scmp.eq.s32.totalorder %s22, 0
      %p63 = por %p61, %p62
      %p64 = scmp.ne.s32.totalorder %s50, %s51
      %p65 = scmp.eq.s32.totalorder %s23, 7
      %p66 = por %p64, %p65
      %p68 = scmp.ne.s32.totalorder %s51, %s67
      %p69 = scmp.eq.s32.totalorder %s23, 0
      %p70 = por %p68, %p69
      %p71 = scmp.ge.s32.totalorder %s24, 1
      %p72 = scmp.lt.s32.totalorder %s24, 3
      %p73 = pnand %p71, %p72
      %p74 = pneg %p73
      %s75 = scalar_select %p74, %s25, 0
      %p76 = scmp.gt.s32.totalorder %s24, 1
      %s77 = scalar_select %p76, %s24, 1
      %p78 = scmp.lt.s32.totalorder %s77, 2
      %s79 = scalar_select %p78, %s77, 2
      %p80 = scmp.ge.s32.totalorder %s36, 1
      %p81 = scmp.lt.s32.totalorder %s36, 3
      %p82 = pnand %p80, %p81
      %p83 = pneg %p82
      %s84 = scalar_select %p83, %s32, 0
      %p85 = scmp.gt.s32.totalorder %s36, 1
      %s86 = scalar_select %p85, %s36, 1
      %p87 = scmp.lt.s32.totalorder %s86, 2
      %s88 = scalar_select %p87, %s86, 2
      %s89 = ssub.s32 %s75, %s84
      %s90 = ssub.s32 %s79, %s88
      %s91 = sor.u32 %s89, %s90
      %p92 = scmp.eq.s32.totalorder %s91, 0
      %s94 = sadd.s32 %s93, 1
      %s95 = scalar_select %p92, %s93, %s94
      %p98 = pneg %p92
      %p99 = scmp.eq.s32.totalorder %s17, 7
      %p100 = por %p98, %p99
      %p101 = scmp.ne.s32.totalorder %s93, %s96
      %p102 = scmp.eq.s32.totalorder %s17, 0
      %p103 = por %p101, %p102
      %p104 = scmp.ne.s32.totalorder %s93, %s96
      %p105 = scmp.eq.s32.totalorder %s22, 7
      %p106 = por %p104, %p105
      %p107 = scmp.ne.s32.totalorder %s96, %s97
      %p108 = scmp.eq.s32.totalorder %s22, 0
      %p109 = por %p107, %p108
      %p110 = scmp.ne.s32.totalorder %s96, %s97
      %p111 = scmp.eq.s32.totalorder %s23, 7
      %p112 = por %p110, %p111
      %p114 = scmp.ne.s32.totalorder %s97, %s113
      %p115 = scmp.eq.s32.totalorder %s23, 0
      %p116 = por %p114, %p115
      %s117 = ssub.s32 %s25, %s32
      %s118 = ssub.s32 %s24, %s36
      %s119 = sor.u32 %s117, %s118
      %p120 = scmp.eq.s32.totalorder %s119, 0
      %s122 = sadd.s32 %s121, 1
      %s123 = scalar_select %p120, %s121, %s122
      %p126 = pneg %p120
      %p127 = scmp.eq.s32.totalorder %s17, 7
      %p128 = por %p126, %p127
      %p129 = scmp.ne.s32.totalorder %s121, %s124
      %p130 = scmp.eq.s32.totalorder %s17, 0
      %p131 = por %p129, %p130
      %p132 = scmp.ne.s32.totalorder %s121, %s124
      %p133 = scmp.eq.s32.totalorder %s22, 7
      %p134 = por %p132, %p133
      %p135 = scmp.ne.s32.totalorder %s124, %s125
      %p136 = scmp.eq.s32.totalorder %s22, 0
      %p137 = por %p135, %p136
      %p138 = scmp.ne.s32.totalorder %s124, %s125
      %p139 = scmp.eq.s32.totalorder %s23, 7
      %p140 = por %p138, %p139
      %p142 = scmp.ne.s32.totalorder %s125, %s141
      %p143 = scmp.eq.s32.totalorder %s23, 0
      %p144 = por %p142, %p143
      %p145 = scmp.le.s32.totalorder 1, %s17
      %p146 = scmp.lt.s32.totalorder %s17, 9
      %p147 = pnand %p145, %p146
      %p148 = pneg %p147
      // Predicated region
      $region9: #{tpu_custom_call.1} parent=5 // pred_check
        _
      $region10: #{tpu_custom_call.1} parent=5 // pred_check_branch
        %150 = sbr.rel (%p147) target = $region12
      $region11: #{tpu_custom_call.1} parent=5 // pred_region
        %s151 = ssub.s32 %s17, 1
      $region12: #{tpu_custom_call.1} parent=5 // pred_fallthru
        _
      %p152 = scmp.lt.s32.totalorder %s17, 8
      // Predicated region
      $region13: #{tpu_custom_call.1} parent=5 // pred_check
        %p153 = pneg %p152
      $region14: #{tpu_custom_call.1} parent=5 // pred_check_branch
        %155 = sbr.rel (%p153) target = $region16
      $region15: #{tpu_custom_call.1} parent=5 // pred_region
        // Predicated region
        $region17: #{tpu_custom_call.1} parent=15 // pred_check
          %p156 = pneg %p57
        $region18: #{tpu_custom_call.1} parent=15 // pred_check_branch
          %158 = sbr.rel (%p156) target = $region20
        $region19: #{tpu_custom_call.1} parent=15 // pred_region
          %s159 = sand.u32 %s47, 1
          %s160 = scalar_lea.sflag [#allocation5], %s159
          %s161 = sand.u32 %s47, 1
          %s162 = smul.addr %s161, 8
          %s163 = scalar_lea.vmem [#allocation4], %s162
          %p164 = scmp.gt.s32.totalorder %s24, 1
          %s165 = scalar_select %p164, %s24, 1
          %p166 = scmp.lt.s32.totalorder %s165, 2
          %s167 = scalar_select %p166, %s165, 2
          %169 = vsyncadd %s160, 0
          %s170 = smul.addr %s167, 8
          %s171 = scalar_lea.hbm %s0, %s170
          %s173 = sshll.u32 %s171, 4
          %s174 = int_to_ptr.hbm [resolvable:$true] %s173
          %s175 = sshll.u32 %s163, 4
          %s176 = int_to_ptr.vmem [resolvable:$true] %s175
          %178 = dma.hbm_to_vmem [thread:$0]  %s174, 128, %s176, %s160
        $region20: #{tpu_custom_call.1} parent=15 // pred_fallthru
          _
        // Predicated region
        $region21: #{tpu_custom_call.1} parent=15 // pred_check
          %p179 = pneg %p103
        $region22: #{tpu_custom_call.1} parent=15 // pred_check_branch
          %181 = sbr.rel (%p179) target = $region24
        $region23: #{tpu_custom_call.1} parent=15 // pred_region
          %s182 = sand.u32 %s93, 1
          %s183 = scalar_lea.sflag [#allocation8], %s182
          %s184 = sand.u32 %s93, 1
          %s185 = smul.addr %s184, 16
          %s186 = scalar_lea.vmem [#allocation7], %s185
          %p187 = scmp.ge.s32.totalorder %s24, 1
          %p188 = scmp.lt.s32.totalorder %s24, 3
          %p189 = pnand %p187, %p188
          %p190 = pneg %p189
          %s191 = scalar_select %p190, %s25, 0
          %p192 = scmp.gt.s32.totalorder %s24, 1
          %s193 = scalar_select %p192, %s24, 1
          %p194 = scmp.lt.s32.totalorder %s193, 2
          %s195 = scalar_select %p194, %s193, 2
          %197 = vsyncadd %s183, 0
          %s198 = smul.addr %s191, 8
          %s199 = sadd.s32 %s195, %s198
          %s200 = smul.addr %s199, 8
          %s201 = scalar_lea.hbm %s1, %s200
          %s202 = sshll.u32 %s201, 4
          %s203 = int_to_ptr.hbm [resolvable:$true] %s202
          %s204 = sshll.u32 %s186, 4
          %s205 = int_to_ptr.vmem [resolvable:$true] %s204
          %210 = dma.hbm_to_vmem [thread:$0]  %s203, 256, %s205, %s183, 512, 128, 8
        $region24: #{tpu_custom_call.1} parent=15 // pred_fallthru
          _
      $region16: #{tpu_custom_call.1} parent=5 // pred_fallthru
        _
      %p211 = scmp.le.s32.totalorder 1, %s17
      %p212 = scmp.lt.s32.totalorder %s17, 9
      %p213 = pnand %p211, %p212
      %p214 = pneg %p213
      // Predicated region
      $region25: #{tpu_custom_call.1} parent=5 // pred_check
        _
      $region26: #{tpu_custom_call.1} parent=5 // pred_check_branch
        %216 = sbr.rel (%p213) target = $region28
      $region27: #{tpu_custom_call.1} parent=5 // pred_region
        %s217 = ssub.s32 %s17, 1
        %s218 = sand.u32 %s50, 1
        %s219 = scalar_lea.sflag [#allocation5], %s218
        %s220 = sand.u32 %s50, 1
        %s221 = smul.addr %s220, 8
        %s222 = scalar_lea.vmem [#allocation4], %s221
        // Predicated region
        $region29: #{tpu_custom_call.1} parent=27 // pred_check
          %p223 = pneg %p63
        $region30: #{tpu_custom_call.1} parent=27 // pred_check_branch
          %225 = sbr.rel (%p223) target = $region32
        $region31: #{tpu_custom_call.1} parent=27 // pred_region
          %227 = dma.done %s219, 128
        $region32: #{tpu_custom_call.1} parent=27 // pred_fallthru
          _
        %s228 = sand.u32 %s96, 1
        %s229 = scalar_lea.sflag [#allocation8], %s228
        %s230 = sand.u32 %s96, 1
        %s231 = smul.addr %s230, 16
        %s232 = scalar_lea.vmem [#allocation7], %s231
        // Predicated region
        $region33: #{tpu_custom_call.1} parent=27 // pred_check
          %p233 = pneg %p109
        $region34: #{tpu_custom_call.1} parent=27 // pred_check_branch
          %235 = sbr.rel (%p233) target = $region36
        $region35: #{tpu_custom_call.1} parent=27 // pred_region
          %237 = dma.done %s229, 256
        $region36: #{tpu_custom_call.1} parent=27 // pred_fallthru
          _
        %s238 = sand.u32 %s50, 1
        %s239 = scalar_lea.sflag [#allocation5], %s238
        %s240 = sand.u32 %s50, 1
        %s241 = smul.addr %s240, 8
        %s242 = scalar_lea.vmem [#allocation4], %s241
        %p243 = pneg %p63
        %p244 = pneg %p60
        %s245 = sand.u32 %s96, 1
        %s246 = scalar_lea.sflag [#allocation8], %s245
        %s247 = sand.u32 %s96, 1
        %s248 = smul.addr %s247, 16
        %s249 = scalar_lea.vmem [#allocation7], %s248
        %p250 = pneg %p109
        %p251 = pneg %p106
        %p252 = pneg %p137
        %p253 = pneg %p134
        %s254 = sand.u32 %s124, 1
        %s255 = scalar_lea.sflag [#allocation6], %s254
        %s256 = sand.u32 %s124, 1
        %s257 = smul.addr %s256, 16
        %s258 = scalar_lea.vmem [#allocation9], %s257
        %p259 = scmp.gt.s32.totalorder %s26, 1
        %s260 = scalar_select %p259, %s26, 1
        %p261 = scmp.lt.s32.totalorder %s260, 2
        %s262 = scalar_select %p261, %s260, 2
        %p263 = scmp.ge.s32.totalorder %s26, 1
        %p264 = scmp.lt.s32.totalorder %s26, 3
        %p265 = pnand %p263, %p264
        %p266 = pneg %p265
        %s267 = scalar_select %p266, %s27, 0
        %p268 = scmp.gt.s32.totalorder %s26, 1
        %s269 = scalar_select %p268, %s26, 1
        %p270 = scmp.lt.s32.totalorder %s269, 2
        %s271 = scalar_select %p270, %s269, 2
        %p272 = scmp.ge.s32.totalorder %s26, 1
        %p273 = scmp.lt.s32.totalorder %s26, 3
        %p274 = pnand %p272, %p273
        %p275 = pneg %p274
        %p276 = pneg %p275
        // Predicated region
        $region37: #{tpu_custom_call.1} parent=27 // pred_check
          _
        $region38: #{tpu_custom_call.1} parent=27 // pred_check_branch
          %278 = sbr.rel (%p275) target = $region40
        $region39: #{tpu_custom_call.1} parent=27 // pred_region
          %279 = vst [vmem:[%s258] sm:$0xff] 0.0
          %280 = vst [vmem:[%s258 + $0x8] sm:$0xff] 0.0
        $region40: #{tpu_custom_call.1} parent=27 // pred_fallthru
          _
        %p281 = scmp.eq.s32.totalorder %s27, 0
        %p282 = pnand %p275, %p281
        %p283 = pneg %p282
        // Predicated region
        $region41: #{tpu_custom_call.1} parent=27 // pred_check
          _
        $region42: #{tpu_custom_call.1} parent=27 // pred_check_branch
          %285 = sbr.rel (%p282) target = $region44
        $region43: #{tpu_custom_call.1} parent=27 // pred_region
          %v286 = vld [vmem:[%s222] sm:$0xff]
          %v287 = vlaneseq
          %v288 = vand.u32 %v287, 127
          %vm289 = vcmp.ge.s32.totalorder %v288, 64
          %v290 = vsel %vm289, 1, 0
          %v291 = vmul.u32 %v290, 64
          %v292 = vsub.s32 %v288, %v291
          %vm293 = vcmp.ge.s32.totalorder %v292, 16
          %vm294 = vcmp.lt.s32.totalorder %v292, 48
          %vm295 = vmand %vm293, %vm294
          %v296 = vlaneseq
          %v297 = vshrl.u32 %v296, 7
          %s298 = smul.u32 %s26, 8
          %v299 = vstv %s298
          %v300 = vadd.s32 %v299, %v297
          %v301 = vmul.u32 %v300, 2
          %v302 = vadd.s32 %v301, %v290
          %vm303 = vcmp.ge.s32.totalorder %v302, 16
          %vm304 = vcmp.lt.s32.totalorder %v302, 48
          %vm305 = vmand %vm303, %vm304
          %v306 = vsel %vm295, 1, 0
          %vm307 = vcmp.eq.s32.totalorder %v306, 1
          %vm308 = vmand %vm305, %vm307
          %v309 = vand.u32 2147483647, %v286
          %vm310 = vcmp.le.f32.partialorder %v309, 0.7853982
          %vm311 = vcmp.lt.s32.totalorder %v286, 0
          %v312 = vand.u32 %v286, 2139095040
          %v313 = vshrl.u32 %v312, 23
          %v314 = vsub.s32 %v313, 127
          %v315 = vand.u32 2147483647, %v286
          %v316 = vand.u32 %v315, 8388607
          %v317 = vor.u32 %v316, 8388608
          %v318 = vsub.s32 0, %v317
          %v319 = vadd.s32 %v314, 1
          %vm320 = vcmp.gt.s32.totalorder %v319, 0
          %v321 = vsel %vm320, %v319, 0
          %v322 = vshrl.u32 %v321, 5
          %v323 = vand.u32 %v321, 31
          %v324 = vsub.s32 32, %v323
          %v325 = vshrl.u32 683565275, %v324
          %v326 = vshll.u32 683565275, %v323
          %v327 = vshrl.u32 2475754826, %v324
          %v328 = vor.u32 %v326, %v327
          %v329 = vshll.u32 2475754826, %v323
          %v330 = vshrl.u32 2131351028, %v324
          %v331 = vor.u32 %v329, %v330
          %v332 = vshll.u32 2131351028, %v323
          %v333 = vshrl.u32 2102212464, %v324
          %v334 = vor.u32 %v332, %v333
          %v335 = vshll.u32 2102212464, %v323
          %v336 = vshrl.u32 920167782, %v324
          %v337 = vor.u32 %v335, %v336
          %v338 = vshll.u32 920167782, %v323
          %v339 = vshrl.u32 1326507024, %v324
          %v340 = vor.u32 %v338, %v339
          %vm341 = vcmp.lt.s32.totalorder %v322, 1
          %vm342 = vcmp.lt.s32.totalorder %v322, 2
          %vm343 = vcmp.lt.s32.totalorder %v322, 3
          %vm344 = vcmp.lt.s32.totalorder %v322, 4
          %v345 = vsel %vm341, %v325, %v328
          %v346 = vsel %vm344, %v334, 2102212464
          %v347 = vsel %vm343, %v331, %v346
          %v348 = vsel %vm342, %v345, %v347
          %v349 = vsel %vm341, %v328, %v331
          %v350 = vsel %vm344, %v337, 920167782
          %v351 = vsel %vm343, %v334, %v350
          %v352 = vsel %vm342, %v349, %v351
          %v353 = vsel %vm341, %v331, %v334
          %v354 = vsel %vm344, %v340, 1326507024
          %v355 = vsel %vm343, %v337, %v354
          %v356 = vsel %vm342, %v353, %v355
          %v357 = vshll.u32 %v317, 8
          %v358 = vand.u32 %v357, 65535
          %v359 = vshrl.u32 %v357, 16
          %v360 = vand.u32 %v356, 65535
          %v361 = vshrl.u32 %v356, 16
          %v362 = vmul.u32 %v358, %v360
          %v363 = vmul.u32 %v358, %v361
          %v364 = vmul.u32 %v359, %v360
          %v365 = vmul.u32 %v359, %v361
          %v366 = vshll.u32 %v363, 16
          %v367 = vshrl.u32 %v363, 16
          %v368 = vshll.u32 %v364, 16
          %v369 = vshrl.u32 %v364, 16
          %vm370 = vc.u32 %v362, %v366
          %v371 = vsel %vm370, 1, 0
          %v372 = vadd.s32 %v362, %v366
          %v373 = vadd.s32 %v365, %v371
          %vm374 = vc.u32 %v372, %v368
          %v375 = vsel %vm374, 1, 0
          %v376 = vadd.s32 %v372, %v368
          %v377 = vadd.s32 %v373, %v375
          %v378 = vadd.s32 %v377, %v367
          %v379 = vadd.s32 %v378, %v369
          %v380 = vand.u32 %v357, 65535
          %v381 = vshrl.u32 %v357, 16
          %v382 = vand.u32 %v352, 65535
          %v383 = vshrl.u32 %v352, 16
          %v384 = vmul.u32 %v380, %v382
          %v385 = vmul.u32 %v380, %v383
          %v386 = vmul.u32 %v381, %v382
          %v387 = vmul.u32 %v381, %v383
          %v388 = vshll.u32 %v385, 16
          %v389 = vshrl.u32 %v385, 16
          %v390 = vshll.u32 %v386, 16
          %v391 = vshrl.u32 %v386, 16
          %vm392 = vc.u32 %v384, %v388
          %v393 = vsel %vm392, 1, 0
          %v394 = vadd.s32 %v384, %v388
          %v395 = vadd.s32 %v387, %v393
          %vm396 = vc.u32 %v394, %v390
          %v397 = vsel %vm396, 1, 0
          %v398 = vadd.s32 %v394, %v390
          %v399 = vadd.s32 %v395, %v397
          %v400 = vadd.s32 %v399, %v389
          %v401 = vadd.s32 %v400, %v391
          %v402 = vmul.u32 %v357, %v348
          %v403 = vadd.s32 %v379, %v398
          %vm404 = vc.u32 %v379, %v398
          %v405 = vadd.s32 %v401, 1
          %v406 = vsel %vm404, %v405, %v401
          %v407 = vadd.s32 %v402, %v406
          %v408 = vadd.s32 %v407, 536870912
          %v409 = vshrl.u32 %v408, 30
          %v410 = vshll.u32 %v409, 30
          %v411 = vsub.s32 %v407, %v410
          %vm412 = vcmp.lt.s32.totalorder %v411, 0
          %v413 = vsub.s32 0, %v411
          %v414 = vsel %vm412, %v413, %v411
          %v415 = vclz %v414
          %v416 = vsub.s32 %v415, 2
          %vm417 = vcmp.gt.s32.totalorder 0, %v416
          %v418 = vsel %vm417, 0, %v416
          %v419 = vsub.s32 32, %v418
          %v420 = vshll.u32 %v411, %v418
          %v421 = vshrl.u32 %v403, %v419
          %v422 = vor.u32 %v420, %v421
          %v423 = vsub.s32 4294967266, %v418
          %v424 = vadd.s32 %v423, 127
          %v425 = vshll.u32 %v424, 23
          %v426 = vor.u32 4788187, %v425
          %v427 = vand.u32 2147483647, %v426
          %v429 = vcvt.s32.f32 %v422
          %v430 = vmul.f32 %v429, %v427
          %v431 = vxor.u32 %v430, 2147483648
          %v432 = vsel %vm311, %v431, %v430
          %v433 = vsub.s32 4, %v409
          %v434 = vsel %vm311, %v433, %v409
          %v435 = vsel %vm310, %v286, %v432
          %v436 = vsel %vm310, 0, %v434
          %v437 = vmul.f32 %v435, %v435
          %v438 = vmul.f32 %v437, -0.001358992
          %v439 = vadd.f32 %v438, 0.041655596
          %v440 = vmul.f32 %v437, %v439
          %v441 = vadd.f32 %v440, -0.4999988
          %v442 = vmul.f32 %v437, %v441
          %v443 = vadd.f32 1.0, %v442
          %v444 = vmul.f32 %v435, %v435
          %v445 = vmul.f32 %v444, -0.00019511016
          %v446 = vadd.f32 %v445, 0.008332121
          %v447 = vmul.f32 %v444, %v446
          %v448 = vadd.f32 %v447, -0.16666654
          %v449 = vmul.f32 %v444, %v448
          %v450 = vadd.f32 %v449, 1.0
          %v451 = vmul.f32 %v450, %v435
          %vm452 = vweird.f32 %v286
          %v453 = vand.u32 %v436, 3
          %vm454 = vcmp.lt.s32.totalorder %v453, 2
          %vm455 = vcmp.eq.s32.totalorder %v453, 0
          %v456 = vxor.u32 %v451, 2147483648
          %v457 = vsel %vm455, %v443, %v456
          %vm458 = vcmp.eq.s32.totalorder %v453, 2
          %v459 = vxor.u32 %v443, 2147483648
          %v460 = vsel %vm458, %v459, %v451
          %v461 = vsel %vm454, %v457, %v460
          %v462 = vsel %vm452, nan, %v461
          %v463 = vsel %vm308, %v462, 0.0
          %464 = vst [vmem:[#allocation2] sm:$0xff] %v463
          %v465 = vand.u32 2147483647, %v286
          %vm466 = vcmp.le.f32.partialorder %v465, 0.7853982
          %vm467 = vcmp.lt.s32.totalorder %v286, 0
          %v468 = vand.u32 %v286, 2139095040
          %v469 = vshrl.u32 %v468, 23
          %v470 = vsub.s32 %v469, 127
          %v471 = vand.u32 2147483647, %v286
          %v472 = vand.u32 %v471, 8388607
          %v473 = vor.u32 %v472, 8388608
          %v474 = vsub.s32 0, %v473
          %v475 = vadd.s32 %v470, 1
          %vm476 = vcmp.gt.s32.totalorder %v475, 0
          %v477 = vsel %vm476, %v475, 0
          %v478 = vshrl.u32 %v477, 5
          %v479 = vand.u32 %v477, 31
          %v480 = vsub.s32 32, %v479
          %v481 = vshrl.u32 683565275, %v480
          %v482 = vshll.u32 683565275, %v479
          %v483 = vshrl.u32 2475754826, %v480
          %v484 = vor.u32 %v482, %v483
          %v485 = vshll.u32 2475754826, %v479
          %v486 = vshrl.u32 2131351028, %v480
          %v487 = vor.u32 %v485, %v486
          %v488 = vshll.u32 2131351028, %v479
          %v489 = vshrl.u32 2102212464, %v480
          %v490 = vor.u32 %v488, %v489
          %v491 = vshll.u32 2102212464, %v479
          %v492 = vshrl.u32 920167782, %v480
          %v493 = vor.u32 %v491, %v492
          %v494 = vshll.u32 920167782, %v479
          %v495 = vshrl.u32 1326507024, %v480
          %v496 = vor.u32 %v494, %v495
          %vm497 = vcmp.lt.s32.totalorder %v478, 1
          %vm498 = vcmp.lt.s32.totalorder %v478, 2
          %vm499 = vcmp.lt.s32.totalorder %v478, 3
          %vm500 = vcmp.lt.s32.totalorder %v478, 4
          %v501 = vsel %vm497, %v481, %v484
          %v502 = vsel %vm500, %v490, 2102212464
          %v503 = vsel %vm499, %v487, %v502
          %v504 = vsel %vm498, %v501, %v503
          %v505 = vsel %vm497, %v484, %v487
          %v506 = vsel %vm500, %v493, 920167782
          %v507 = vsel %vm499, %v490, %v506
          %v508 = vsel %vm498, %v505, %v507
          %v509 = vsel %vm497, %v487, %v490
          %v510 = vsel %vm500, %v496, 1326507024
          %v511 = vsel %vm499, %v493, %v510
          %v512 = vsel %vm498, %v509, %v511
          %v513 = vshll.u32 %v473, 8
          %v514 = vand.u32 %v513, 65535
          %v515 = vshrl.u32 %v513, 16
          %v516 = vand.u32 %v512, 65535
          %v517 = vshrl.u32 %v512, 16
          %v518 = vmul.u32 %v514, %v516
          %v519 = vmul.u32 %v514, %v517
          %v520 = vmul.u32 %v515, %v516
          %v521 = vmul.u32 %v515, %v517
          %v522 = vshll.u32 %v519, 16
          %v523 = vshrl.u32 %v519, 16
          %v524 = vshll.u32 %v520, 16
          %v525 = vshrl.u32 %v520, 16
          %vm526 = vc.u32 %v518, %v522
          %v527 = vsel %vm526, 1, 0
          %v528 = vadd.s32 %v518, %v522
          %v529 = vadd.s32 %v521, %v527
          %vm530 = vc.u32 %v528, %v524
          %v531 = vsel %vm530, 1, 0
          %v532 = vadd.s32 %v528, %v524
          %v533 = vadd.s32 %v529, %v531
          %v534 = vadd.s32 %v533, %v523
          %v535 = vadd.s32 %v534, %v525
          %v536 = vand.u32 %v513, 65535
          %v537 = vshrl.u32 %v513, 16
          %v538 = vand.u32 %v508, 65535
          %v539 = vshrl.u32 %v508, 16
          %v540 = vmul.u32 %v536, %v538
          %v541 = vmul.u32 %v536, %v539
          %v542 = vmul.u32 %v537, %v538
          %v543 = vmul.u32 %v537, %v539
          %v544 = vshll.u32 %v541, 16
          %v545 = vshrl.u32 %v541, 16
          %v546 = vshll.u32 %v542, 16
          %v547 = vshrl.u32 %v542, 16
          %vm548 = vc.u32 %v540, %v544
          %v549 = vsel %vm548, 1, 0
          %v550 = vadd.s32 %v540, %v544
          %v551 = vadd.s32 %v543, %v549
          %vm552 = vc.u32 %v550, %v546
          %v553 = vsel %vm552, 1, 0
          %v554 = vadd.s32 %v550, %v546
          %v555 = vadd.s32 %v551, %v553
          %v556 = vadd.s32 %v555, %v545
          %v557 = vadd.s32 %v556, %v547
          %v558 = vmul.u32 %v513, %v504
          %v559 = vadd.s32 %v535, %v554
          %vm560 = vc.u32 %v535, %v554
          %v561 = vadd.s32 %v557, 1
          %v562 = vsel %vm560, %v561, %v557
          %v563 = vadd.s32 %v558, %v562
          %v564 = vadd.s32 %v563, 536870912
          %v565 = vshrl.u32 %v564, 30
          %v566 = vshll.u32 %v565, 30
          %v567 = vsub.s32 %v563, %v566
          %vm568 = vcmp.lt.s32.totalorder %v567, 0
          %v569 = vsub.s32 0, %v567
          %v570 = vsel %vm568, %v569, %v567
          %v571 = vclz %v570
          %v572 = vsub.s32 %v571, 2
          %vm573 = vcmp.gt.s32.totalorder 0, %v572
          %v574 = vsel %vm573, 0, %v572
          %v575 = vsub.s32 32, %v574
          %v576 = vshll.u32 %v567, %v574
          %v577 = vshrl.u32 %v559, %v575
          %v578 = vor.u32 %v576, %v577
          %v579 = vsub.s32 4294967266, %v574
          %v580 = vadd.s32 %v579, 127
          %v581 = vshll.u32 %v580, 23
          %v582 = vor.u32 4788187, %v581
          %v583 = vand.u32 2147483647, %v582
          %v585 = vcvt.s32.f32 %v578
          %v586 = vmul.f32 %v585, %v583
          %v587 = vxor.u32 %v586, 2147483648
          %v588 = vsel %vm467, %v587, %v586
          %v589 = vsub.s32 4, %v565
          %v590 = vsel %vm467, %v589, %v565
          %v591 = vsel %vm466, %v286, %v588
          %v592 = vsel %vm466, 0, %v590
          %v593 = vmul.f32 %v591, %v591
          %v594 = vmul.f32 %v593, -0.001358992
          %v595 = vadd.f32 %v594, 0.041655596
          %v596 = vmul.f32 %v593, %v595
          %v597 = vadd.f32 %v596, -0.4999988
          %v598 = vmul.f32 %v593, %v597
          %v599 = vadd.f32 1.0, %v598
          %v600 = vmul.f32 %v591, %v591
          %v601 = vmul.f32 %v600, -0.00019511016
          %v602 = vadd.f32 %v601, 0.008332121
          %v603 = vmul.f32 %v600, %v602
          %v604 = vadd.f32 %v603, -0.16666654
          %v605 = vmul.f32 %v600, %v604
          %v606 = vadd.f32 %v605, 1.0
          %v607 = vmul.f32 %v606, %v591
          %vm608 = vweird.f32 %v286
          %v609 = vadd.s32 %v592, 3
          %v610 = vand.u32 %v609, 3
          %vm611 = vcmp.lt.s32.totalorder %v610, 2
          %vm612 = vcmp.eq.s32.totalorder %v610, 0
          %v613 = vxor.u32 %v607, 2147483648
          %v614 = vsel %vm612, %v599, %v613
          %vm615 = vcmp.eq.s32.totalorder %v610, 2
          %v616 = vxor.u32 %v599, 2147483648
          %v617 = vsel %vm615, %v616, %v607
          %v618 = vsel %vm611, %v614, %v617
          %v619 = vsel %vm608, nan, %v618
          %v620 = vsel %vm308, %v619, 0.0
          %621 = vst [vmem:[#allocation3] sm:$0xff] %v620
        $region44: #{tpu_custom_call.1} parent=27 // pred_fallthru
          _
        // Predicated region
        $region45: #{tpu_custom_call.1} parent=27 // pred_check
          _
        $region46: #{tpu_custom_call.1} parent=27 // pred_check_branch
          %623 = sbr.rel (%p274) target = $region48
        $region47: #{tpu_custom_call.1} parent=27 // pred_region
          %v624 = vld [vmem:[%s232] sm:$0xff]
          %s625 = scalar_lea.vmem %s232, 8 [#allocation7]
          %v626 = vld [vmem:[%s625] sm:$0xff]
          %v627 = vld [vmem:[#allocation2] sm:$0xff]
          %v628 = vld [vmem:[#allocation3] sm:$0xff]
          %v629 = vmul.f32 %v624, %v627
          %v630 = vmul.f32 %v626, %v628
          %v631 = vsub.f32 %v629, %v630
          %632 = vst [vmem:[%s258] sm:$0xff] %v631
          %v633 = vmul.f32 %v624, %v628
          %v634 = vmul.f32 %v626, %v627
          %v635 = vadd.f32 %v633, %v634
          %s636 = scalar_lea.vmem %s258, 8 [#allocation9]
          %637 = vst [vmem:[%s636] sm:$0xff] %v635
        $region48: #{tpu_custom_call.1} parent=27 // pred_fallthru
          _
        %s638 = sand.u32 %s124, 1
        %s639 = scalar_lea.sflag [#allocation6], %s638
        %s640 = sand.u32 %s124, 1
        %s641 = smul.addr %s640, 16
        %s642 = scalar_lea.vmem [#allocation9], %s641
        // Predicated region
        $region49: #{tpu_custom_call.1} parent=27 // pred_check
          %p643 = pneg %p134
        $region50: #{tpu_custom_call.1} parent=27 // pred_check_branch
          %645 = sbr.rel (%p643) target = $region52
        $region51: #{tpu_custom_call.1} parent=27 // pred_region
          %647 = vsyncadd %s639, 0
          %s648 = smul.addr %s27, 8
          %s649 = sadd.s32 %s26, %s648
          %s650 = smul.addr %s649, 8
          %s651 = scalar_lea.hbm %s2, %s650
          %s652 = sshll.u32 %s642, 4
          %s653 = int_to_ptr.vmem [resolvable:$true] %s652
          %s654 = sshll.u32 %s651, 4
          %s655 = int_to_ptr.hbm [resolvable:$true] %s654
          %660 = dma.vmem_to_hbm [thread:$0]  %s653, 256, %s655, %s639, 128, 512, 8
        $region52: #{tpu_custom_call.1} parent=27 // pred_fallthru
          _
      $region28: #{tpu_custom_call.1} parent=5 // pred_fallthru
        _
      %p661 = scmp.le.s32.totalorder 2, %s17
      // Predicated region
      $region53: #{tpu_custom_call.1} parent=5 // pred_check
        %p662 = pneg %p661
      $region54: #{tpu_custom_call.1} parent=5 // pred_check_branch
        %664 = sbr.rel (%p662) target = $region56
      $region55: #{tpu_custom_call.1} parent=5 // pred_region
        %s665 = ssub.s32 %s17, 2
        // Predicated region
        $region57: #{tpu_custom_call.1} parent=55 // pred_check
          %p666 = pneg %p140
        $region58: #{tpu_custom_call.1} parent=55 // pred_check_branch
          %668 = sbr.rel (%p666) target = $region60
        $region59: #{tpu_custom_call.1} parent=55 // pred_region
          %s669 = sand.u32 %s125, 1
          %s670 = scalar_lea.sflag [#allocation6], %s669
          %s671 = sand.u32 %s125, 1
          %s672 = smul.addr %s671, 16
          %s673 = scalar_lea.vmem [#allocation9], %s672
          %675 = dma.done %s670, 256
        $region60: #{tpu_custom_call.1} parent=55 // pred_fallthru
          _
      $region56: #{tpu_custom_call.1} parent=5 // pred_fallthru
        _
    $region6: #{tpu_custom_call.1} parent=1 // loop_footer
      %s21 = sadd.s32 1, %s17
    $region7: #{tpu_custom_call.1} parent=1 // loop_footer_branch
      %16 = sbr.rel target = $region3
    $region8: #{tpu_custom_call.1} parent=1 // loop_exit
      _
    %676 = vsyncpa [#allocation5], 1
    %s677 = scalar_lea.sflag [#allocation5], 1
    %678 = vsyncpa %s677, 1
    %679 = vsyncpa [#allocation8], 1
    %s680 = scalar_lea.sflag [#allocation8], 1
    %681 = vsyncpa %s680, 1
    %682 = vsyncpa [#allocation6], 1
    %s683 = scalar_lea.sflag [#allocation6], 1
    %684 = vsyncpa %s683, 1

</llo_original>
